<compile_context>
chip_gen: v7x
topology: tpu7x:2x2x1
jax: 0.10.0
libtpu: 0.0.40
codegen_flags: <defaults>
</compile_context>

<pallas_src>
import functools

import jax
import jax.numpy as jnp
from jax.experimental import pallas as pl
from jax.experimental.pallas import tpu as pltpu


def _round_up(x, m):
    return ((x + m - 1) // m) * m


def _custom_loss_kernel(out_ref, lab_ref, loss_ref, *,
                        lambda_val, loss_e_lambda, n_valid, tile):
    step = pl.program_id(0)

    # Upcast in-kernel so bf16 producers stream half the HBM bytes.
    outs = out_ref[...].astype(jnp.float32)   # (6, tile)
    labs = lab_ref[...].astype(jnp.float32)   # (6, tile)

    p_pred = outs[0:1, :]                     # (1, tile)
    s_pred = outs[1:2, :]
    logits = outs[2:6, :]                     # (4, tile)

    p_g = labs[0:1, :]
    s_g = labs[1:2, :]
    cg = labs[2:6, :]                         # (4, tile) one-hot (or all-zero)

    # --- cross entropy (reduction='none'), numerically stable -------------
    m = jnp.max(logits, axis=0, keepdims=True)                       # (1, tile)
    lse = m + jnp.log(jnp.sum(jnp.exp(logits - m), axis=0, keepdims=True))
    # For one-hot cg, sum(logits * cg) == logits[argmax(cg)].
    picked = jnp.sum(logits * cg, axis=0, keepdims=True)
    loss_e = lse - picked                                             # (1, tile)

    # --- one-hot rows are exactly {0,1} -> use them directly as weights ---
    c0 = cg[0:1, :]
    c1 = cg[1:2, :]
    c2 = cg[2:3, :]
    c3 = cg[3:4, :]
    use_p = c1 + c3
    use_s = c2 + c3
    any_match = (c0 + c1) + use_s

    dp = p_g - p_pred
    ds = s_g - s_pred

    total = (jnp.float32(loss_e_lambda) * loss_e) * any_match \
        + jnp.float32(lambda_val) * (dp * dp * use_p + ds * ds * use_s)

    # --- tail mask: last block's columns past n_valid hold undefined data --
    # (jnp.where, not a multiply, so garbage NaN/Inf cannot contaminate the sum)
    if n_valid % tile != 0:
        col = jax.lax.broadcasted_iota(jnp.int32, total.shape, 1) + step * tile
        total = jnp.where(col < n_valid, total, jnp.float32(0.0))

    loss_ref[0, 0] = jnp.sum(total)


def custom_loss_fm(outputs_fm, labels_fm, lambda_val, loss_e_lambda=1.0,
                   tile_n=131072):
    """Core path: feature-major (6, N) inputs, zero wrapper copies.

    Rows: outputs_fm = [p_pred, s_pred, logit0..3]
          labels_fm  = [p_gt,   s_gt,   onehot0..3]
    Returns the scalar mean loss (matches the PyTorch CustomLoss forward).
    """
    C, N = outputs_fm.shape
    assert C == 6 and labels_fm.shape == (C, N)

    tile = _round_up(min(tile_n, _round_up(N, 128)), 128)
    num_tiles = pl.cdiv(N, tile)

    kernel = functools.partial(
        _custom_loss_kernel,
        lambda_val=float(lambda_val),
        loss_e_lambda=float(loss_e_lambda),
        n_valid=N,
        tile=tile,
    )
    partials = pl.pallas_call(
        kernel,
        out_shape=jax.ShapeDtypeStruct((num_tiles, 1), jnp.float32),
        grid=(num_tiles,),
        in_specs=[
            pl.BlockSpec((C, tile), lambda i: (0, i)),
            pl.BlockSpec((C, tile), lambda i: (0, i)),
        ],
        out_specs=pl.BlockSpec(
            (1, 1), lambda i: (i, 0), memory_space=pltpu.MemorySpace.SMEM
        ),
        compiler_params=pltpu.CompilerParams(
            # Per-tile partial sums -> independent grid steps: lets Mosaic
            # shard across both v7x TensorCores; neutral on v5e/v6e.
            dimension_semantics=("parallel",),
            # 16 MiB of live input buffers at tile_n=131072; 48 MiB cap is
            # safe on v5e/v6e (128 MiB VMEM) and v7x (64 MiB per TC).
            vmem_limit_bytes=48 * 1024 * 1024,
        ),
    )(outputs_fm, labels_fm)

    return jnp.sum(partials) / jnp.float32(N)


def custom_loss(outputs, labels, lambda_val, loss_e_lambda=1.0, tile_n=131072):
    """(N, 6) interface matching the PyTorch module.

    Performs a single layout-change copy per array (no pad pass).
    """
    N, C = outputs.shape
    assert C == 6 and labels.shape == (N, C)
    # TODO(synk): best case is the producer emitting feature-major (6, N)
    # directly (call custom_loss_fm and skip this copy entirely), or folding
    # this transpose into the producing jit so XLA fuses it upstream.
    return custom_loss_fm(outputs.T, labels.T, lambda_val, loss_e_lambda, tile_n)


def _reference_loss(outputs, labels, lambda_val, loss_e_lambda=1.0):
    """Pure-JAX reference mirroring the PyTorch module exactly."""
    p_pred, s_pred = outputs[:, 0], outputs[:, 1]
    logits = outputs[:, 2:]
    p_g, s_g = labels[:, 0], labels[:, 1]
    cg = labels[:, 2:]

    no_ps = jnp.all(cg == jnp.array([1, 0, 0, 0], jnp.float32), axis=1)
    only_p = jnp.all(cg == jnp.array([0, 1, 0, 0], jnp.float32), axis=1)
    only_s = jnp.all(cg == jnp.array([0, 0, 1, 0], jnp.float32), axis=1)
    both_ps = jnp.all(cg == jnp.array([0, 0, 0, 1], jnp.float32), axis=1)

    tgt = jnp.argmax(cg, axis=1)
    lse = jax.scipy.special.logsumexp(logits, axis=1)
    loss_e = lse - jnp.take_along_axis(logits, tgt[:, None], axis=1)[:, 0]
    loss_p = (p_g - p_pred) ** 2
    loss_s = (s_g - s_pred) ** 2

    total = jnp.zeros_like(p_pred)
    total = jnp.where(no_ps, loss_e_lambda * loss_e, total)
    total = jnp.where(only_p, lambda_val * loss_p + loss_e_lambda * loss_e, total)
    total = jnp.where(only_s, lambda_val * loss_s + loss_e_lambda * loss_e, total)
    total = jnp.where(
        both_ps, lambda_val * (loss_p + loss_s) + loss_e_lambda * loss_e, total
    )
    return jnp.mean(total)


if __name__ == "__main__":
    key = jax.random.PRNGKey(0)
    k_out, k_ps, k_cls = jax.random.split(key, 3)

    N = 1000                    # deliberately NOT a multiple of 128/tile
    lambda_val = 0.5

    # outputs: [p_pred, s_pred, 4 confidence logits]
    outputs = jax.random.normal(k_out, (N, 6), dtype=jnp.float32)

    # labels: [p_gt, s_gt, one-hot(4) confidence ground truth]
    ps_gt = jax.random.normal(k_ps, (N, 2), dtype=jnp.float32)
    classes = jax.random.randint(k_cls, (N,), 0, 4)
    conf_gt = jax.nn.one_hot(classes, 4, dtype=jnp.float32)
    labels = jnp.concatenate([ps_gt, conf_gt], axis=1)

    ref = _reference_loss(outputs, labels, lambda_val)

    # 1) Default large-tile path: single partial block, tail mask exercised.
    loss = jax.block_until_ready(custom_loss(outputs, labels, lambda_val))
    assert jnp.allclose(loss, ref, rtol=1e-5, atol=1e-5), (loss, ref)

    # 2) Multi-tile path: per-tile partial sums over a "parallel" grid axis.
    loss_mt = jax.block_until_ready(
        custom_loss(outputs, labels, lambda_val, tile_n=256))
    assert jnp.allclose(loss_mt, ref, rtol=1e-5, atol=1e-5), (loss_mt, ref)

    # 3) bf16 inputs stream at half the HBM bytes; kernel upcasts in VMEM.
    loss_bf16 = jax.block_until_ready(
        custom_loss(outputs.astype(jnp.bfloat16),
                    labels.astype(jnp.bfloat16), lambda_val))
    assert jnp.allclose(loss_bf16, ref, rtol=3e-2, atol=1e-3), (loss_bf16, ref)

    print("KERNEL_OK")
</pallas_src>

<mosaic_0001>
module attributes {stable_mosaic.version = 11 : i64} {
  func.func @_custom_loss_kernel(%arg0: i32, %arg1: memref<6x1024xf32, #tpu.memory_space<vmem>>, %arg2: memref<6x1024xf32, #tpu.memory_space<vmem>>, %arg3: memref<1x1xf32, #tpu.memory_space<smem>>) attributes {dimension_semantics = [#tpu.dimension_semantics<parallel>], iteration_bounds = array<i64: 1>, scalar_prefetch = 0 : i64, scratch_operands = 0 : i64, tpu.core_type = #tpu.core_type<tc>, window_params = [{transform_indices = @transform_0, window_bounds = array<i64: 6, 1024>}, {transform_indices = @transform_1, window_bounds = array<i64: 6, 1024>}, {transform_indices = @transform_2, window_bounds = array<i64: 1, 1>}]} {
    %c0 = arith.constant 0 : index
    %c0_0 = arith.constant 0 : index
    %0 = vector.load %arg1[%c0, %c0_0] : memref<6x1024xf32, #tpu.memory_space<vmem>>, vector<6x1024xf32>
    %c0_1 = arith.constant 0 : index
    %c0_2 = arith.constant 0 : index
    %1 = vector.load %arg2[%c0_1, %c0_2] : memref<6x1024xf32, #tpu.memory_space<vmem>>, vector<6x1024xf32>
    %2 = vector.extract_strided_slice %0 {offsets = [0, 0], sizes = [1, 1024], strides = [1, 1]} : vector<6x1024xf32> to vector<1x1024xf32>
    %3 = vector.extract_strided_slice %0 {offsets = [1, 0], sizes = [1, 1024], strides = [1, 1]} : vector<6x1024xf32> to vector<1x1024xf32>
    %4 = vector.extract_strided_slice %0 {offsets = [2, 0], sizes = [4, 1024], strides = [1, 1]} : vector<6x1024xf32> to vector<4x1024xf32>
    %5 = vector.extract_strided_slice %1 {offsets = [0, 0], sizes = [1, 1024], strides = [1, 1]} : vector<6x1024xf32> to vector<1x1024xf32>
    %6 = vector.extract_strided_slice %1 {offsets = [1, 0], sizes = [1, 1024], strides = [1, 1]} : vector<6x1024xf32> to vector<1x1024xf32>
    %7 = vector.extract_strided_slice %1 {offsets = [2, 0], sizes = [4, 1024], strides = [1, 1]} : vector<6x1024xf32> to vector<4x1024xf32>
    %cst = arith.constant dense<0xFF800000> : vector<1024xf32>
    %8 = vector.multi_reduction <maximumf>, %4, %cst [0] : vector<4x1024xf32> to vector<1024xf32>
    %9 = vector.shape_cast %8 : vector<1024xf32> to vector<1x1024xf32>
    %10 = vector.broadcast %9 : vector<1x1024xf32> to vector<4x1024xf32>
    %11 = arith.subf %4, %10 : vector<4x1024xf32>
    %12 = math.exp %11 : vector<4x1024xf32>
    %cst_3 = arith.constant dense<0.000000e+00> : vector<1024xf32>
    %13 = vector.multi_reduction <add>, %12, %cst_3 [0] : vector<4x1024xf32> to vector<1024xf32>
    %14 = vector.shape_cast %13 : vector<1024xf32> to vector<1x1024xf32>
    %15 = math.log %14 : vector<1x1024xf32>
    %16 = arith.addf %9, %15 : vector<1x1024xf32>
    %17 = arith.mulf %4, %7 : vector<4x1024xf32>
    %cst_4 = arith.constant dense<0.000000e+00> : vector<1024xf32>
    %18 = vector.multi_reduction <add>, %17, %cst_4 [0] : vector<4x1024xf32> to vector<1024xf32>
    %19 = vector.shape_cast %18 : vector<1024xf32> to vector<1x1024xf32>
    %20 = arith.subf %16, %19 : vector<1x1024xf32>
    %21 = vector.extract_strided_slice %7 {offsets = [0, 0], sizes = [1, 1024], strides = [1, 1]} : vector<4x1024xf32> to vector<1x1024xf32>
    %22 = vector.extract_strided_slice %7 {offsets = [1, 0], sizes = [1, 1024], strides = [1, 1]} : vector<4x1024xf32> to vector<1x1024xf32>
    %23 = vector.extract_strided_slice %7 {offsets = [2, 0], sizes = [1, 1024], strides = [1, 1]} : vector<4x1024xf32> to vector<1x1024xf32>
    %24 = vector.extract_strided_slice %7 {offsets = [3, 0], sizes = [1, 1024], strides = [1, 1]} : vector<4x1024xf32> to vector<1x1024xf32>
    %25 = arith.addf %22, %24 : vector<1x1024xf32>
    %26 = arith.addf %23, %24 : vector<1x1024xf32>
    %27 = arith.addf %21, %22 : vector<1x1024xf32>
    %28 = arith.addf %27, %26 : vector<1x1024xf32>
    %29 = arith.subf %5, %2 : vector<1x1024xf32>
    %30 = arith.subf %6, %3 : vector<1x1024xf32>
    %cst_5 = arith.constant 1.000000e+00 : f32
    %31 = vector.broadcast %cst_5 : f32 to vector<1x1024xf32>
    %32 = arith.mulf %31, %20 : vector<1x1024xf32>
    %33 = arith.mulf %32, %28 : vector<1x1024xf32>
    %34 = arith.mulf %29, %29 : vector<1x1024xf32>
    %35 = arith.mulf %34, %25 : vector<1x1024xf32>
    %36 = arith.mulf %30, %30 : vector<1x1024xf32>
    %37 = arith.mulf %36, %26 : vector<1x1024xf32>
    %38 = arith.addf %35, %37 : vector<1x1024xf32>
    %cst_6 = arith.constant 5.000000e-01 : f32
    %39 = vector.broadcast %cst_6 : f32 to vector<1x1024xf32>
    %40 = arith.mulf %39, %38 : vector<1x1024xf32>
    %41 = arith.addf %33, %40 : vector<1x1024xf32>
    %42 = tpu.iota {dimensions = array<i32: 1>} : vector<1x1024xi32>
    %c1024_i32 = arith.constant 1024 : i32
    %43 = arith.muli %arg0, %c1024_i32 : i32
    %44 = vector.broadcast %43 : i32 to vector<1x1024xi32>
    %45 = arith.addi %42, %44 : vector<1x1024xi32>
    %c1000_i32 = arith.constant 1000 : i32
    %46 = vector.broadcast %c1000_i32 : i32 to vector<1x1024xi32>
    %47 = arith.cmpi slt, %45, %46 : vector<1x1024xi32>
    %cst_7 = arith.constant 0.000000e+00 : f32
    %48 = vector.broadcast %cst_7 : f32 to vector<1x1024xf32>
    %49 = arith.select %47, %41, %48 : vector<1x1024xi1>, vector<1x1024xf32>
    %50 = vector.shape_cast %49 : vector<1x1024xf32> to vector<1x1x1024xf32>
    %cst_8 = arith.constant dense<0.000000e+00> : vector<1xf32>
    %51 = vector.multi_reduction <add>, %50, %cst_8 [1, 2] : vector<1x1x1024xf32> to vector<1xf32>
    %52 = vector.shape_cast %51 : vector<1xf32> to vector<1x1x1xf32>
    %53 = vector.extract %52[0, 0, 0] : f32 from vector<1x1x1xf32>
    %c0_9 = arith.constant 0 : index
    %c0_10 = arith.constant 0 : index
    %54 = memref.load %arg3[%c0_9, %c0_10] : memref<1x1xf32, #tpu.memory_space<smem>>
    memref.store %53, %arg3[%c0_9, %c0_10] : memref<1x1xf32, #tpu.memory_space<smem>>
    return
  }
  func.func @transform_0(%arg0: i32) -> (i32, i32) {
    %c0_i32 = arith.constant 0 : i32
    %c0_i32_0 = arith.constant 0 : i32
    return %c0_i32, %arg0 : i32, i32
  }
  func.func @transform_1(%arg0: i32) -> (i32, i32) {
    %c0_i32 = arith.constant 0 : i32
    %c0_i32_0 = arith.constant 0 : i32
    return %c0_i32, %arg0 : i32, i32
  }
  func.func @transform_2(%arg0: i32) -> (i32, i32) {
    %c0_i32 = arith.constant 0 : i32
    %c0_i32_0 = arith.constant 0 : i32
    return %arg0, %c0_i32 : i32, i32
  }
}

</mosaic_0001>

<llo_original>
// kernel: tpu_custom_call.1
$region0: #{tpu_custom_call.1}
  #allocation0 [shape = 'u32[]', space=smem, size = 0x4, offset = 0x4, fixed_abs, tag = 'smem constant byte address 0x4 - core index']
  #allocation1 [shape = 'u32[144,128]{1,0:T(1,128)}', space=vmem, size = 0x12000, scoped, tag = 'internal scratch']
  %s0 = inlined_call_operand.hbm [shape: f32[6,1000], index: 0, kind: input, shape index: {}]
  %s1 = inlined_call_operand.hbm [shape: f32[6,1000], index: 1, kind: input, shape index: {}]
  %s2 = inlined_call_operand.hbm [shape: f32[1,1], index: 2, kind: output, shape index: {}]
  %s3 = sld [smem:[#allocation0]]
  $region26: #{tpu_custom_call.1} parent=0
    _
  %s5 = ssub.s32 1, %s3
  %s6 = scalar_select 0, %s5, %s3
  $region1: #{tpu_custom_call.1} parent=0
    #allocation2 [shape = 'u8[32768]{0}', space=vmem, size = 0x8000, scoped, tag = 'input window, operand 0, single buffered']
    #allocation3 [shape = 's32[1]{0}', space=sflag, size = 0x4, scoped, tag = 'scoped memory for tpu_custom_call.1']
    #allocation4 [shape = 's32[1]{0}', space=sflag, size = 0x4, scoped, tag = 'scoped memory for tpu_custom_call.1']
    #allocation5 [shape = 'u8[32768]{0}', space=vmem, size = 0x8000, scoped, tag = 'input window, operand 1, single buffered']
    #allocation6 [shape = 's32[1]{0}', space=sflag, size = 0x4, scoped, tag = 'scoped memory for tpu_custom_call.1']
    #allocation7 [shape = 'u8[512]{0}', space=smem, size = 0x200, scoped, tag = 'output window, operand 0, single buffered']
    %7 = vsyncpa [#allocation3], 0
    %8 = vsyncpa [#allocation6], 0
    %9 = vsyncpa [#allocation4], 0
    // Predicated region
    $region2: #{tpu_custom_call.1} parent=1 // pred_check
      _
    $region3: #{tpu_custom_call.1} parent=1 // pred_check_branch
      %11 = sbr.rel (0) target = $region5
    $region4: #{tpu_custom_call.1} parent=1 // pred_region
      %s13 = ssub.s32 1024, 1024
      %14 = vsyncadd [#allocation3], %s13
      %s16 = sshll.u32 [#allocation2], 4
      %s17 = int_to_ptr.vmem [resolvable:$true] %s16
      %19 = dma.hbm_to_vmem [thread:$0]  %s0, 1024, %s17, [#allocation3]
    $region5: #{tpu_custom_call.1} parent=1 // pred_fallthru
      _
    // Predicated region
    $region6: #{tpu_custom_call.1} parent=1 // pred_check
      _
    $region7: #{tpu_custom_call.1} parent=1 // pred_check_branch
      %21 = sbr.rel (0) target = $region9
    $region8: #{tpu_custom_call.1} parent=1 // pred_region
      %s23 = ssub.s32 1024, 1024
      %24 = vsyncadd [#allocation6], %s23
      %s26 = sshll.u32 [#allocation5], 4
      %s27 = int_to_ptr.vmem [resolvable:$true] %s26
      %29 = dma.hbm_to_vmem [thread:$0]  %s1, 1024, %s27, [#allocation6]
    $region9: #{tpu_custom_call.1} parent=1 // pred_fallthru
      _
    // Predicated region
    $region10: #{tpu_custom_call.1} parent=1 // pred_check
      _
    $region11: #{tpu_custom_call.1} parent=1 // pred_check_branch
      %31 = sbr.rel (0) target = $region13
    $region12: #{tpu_custom_call.1} parent=1 // pred_region
      %32 = dma.done [#allocation3], 1024
    $region13: #{tpu_custom_call.1} parent=1 // pred_fallthru
      _
    // Predicated region
    $region14: #{tpu_custom_call.1} parent=1 // pred_check
      _
    $region15: #{tpu_custom_call.1} parent=1 // pred_check_branch
      %34 = sbr.rel (0) target = $region17
    $region16: #{tpu_custom_call.1} parent=1 // pred_region
      %35 = dma.done [#allocation6], 1024
    $region17: #{tpu_custom_call.1} parent=1 // pred_fallthru
      _
    %v36 = vld [vmem:[#allocation2] sm:$0x3f]
    %v37 = vld [vmem:[#allocation2 + $0x8] sm:$0x3f]
    %v38 = vld [vmem:[#allocation2 + $0x10] sm:$0x3f]
    %v39 = vld [vmem:[#allocation2 + $0x18] sm:$0x3f]
    %v40 = vld [vmem:[#allocation2 + $0x20] sm:$0x3f]
    %v41 = vld [vmem:[#allocation2 + $0x28] sm:$0x3f]
    %v42 = vld [vmem:[#allocation2 + $0x30] sm:$0x3f]
    %v43 = vld [vmem:[#allocation2 + $0x38] sm:$0x3f]
    %v44 = vld [vmem:[#allocation5] sm:$0x3f]
    %v45 = vld [vmem:[#allocation5 + $0x8] sm:$0x3f]
    %v46 = vld [vmem:[#allocation5 + $0x10] sm:$0x3f]
    %v47 = vld [vmem:[#allocation5 + $0x18] sm:$0x3f]
    %v48 = vld [vmem:[#allocation5 + $0x20] sm:$0x3f]
    %v49 = vld [vmem:[#allocation5 + $0x28] sm:$0x3f]
    %v50 = vld [vmem:[#allocation5 + $0x30] sm:$0x3f]
    %v51 = vld [vmem:[#allocation5 + $0x38] sm:$0x3f]
    %vm52 = vcmask 1045506
    %v53 = vsel %vm52, %v36, -inf
    %v54 = vrot.slane %v53, 4
    %v55 = vmax.f32 %v53, %v54
    %v56 = vrot.slane %v55, 2
    %v57 = vmax.f32 %v55, %v56
    %v58 = vrot.slane %v57, 1
    %v59 = vmax.f32 %v57, %v58
    %v60 = vsel %vm52, %v37, -inf
    %v61 = vrot.slane %v60, 4
    %v62 = vmax.f32 %v60, %v61
    %v63 = vrot.slane %v62, 2
    %v64 = vmax.f32 %v62, %v63
    %v65 = vrot.slane %v64, 1
    %v66 = vmax.f32 %v64, %v65
    %v67 = vsel %vm52, %v38, -inf
    %v68 = vrot.slane %v67, 4
    %v69 = vmax.f32 %v67, %v68
    %v70 = vrot.slane %v69, 2
    %v71 = vmax.f32 %v69, %v70
    %v72 = vrot.slane %v71, 1
    %v73 = vmax.f32 %v71, %v72
    %v74 = vsel %vm52, %v39, -inf
    %v75 = vrot.slane %v74, 4
    %v76 = vmax.f32 %v74, %v75
    %v77 = vrot.slane %v76, 2
    %v78 = vmax.f32 %v76, %v77
    %v79 = vrot.slane %v78, 1
    %v80 = vmax.f32 %v78, %v79
    %v81 = vsel %vm52, %v40, -inf
    %v82 = vrot.slane %v81, 4
    %v83 = vmax.f32 %v81, %v82
    %v84 = vrot.slane %v83, 2
    %v85 = vmax.f32 %v83, %v84
    %v86 = vrot.slane %v85, 1
    %v87 = vmax.f32 %v85, %v86
    %v88 = vsel %vm52, %v41, -inf
    %v89 = vrot.slane %v88, 4
    %v90 = vmax.f32 %v88, %v89
    %v91 = vrot.slane %v90, 2
    %v92 = vmax.f32 %v90, %v91
    %v93 = vrot.slane %v92, 1
    %v94 = vmax.f32 %v92, %v93
    %v95 = vsel %vm52, %v42, -inf
    %v96 = vrot.slane %v95, 4
    %v97 = vmax.f32 %v95, %v96
    %v98 = vrot.slane %v97, 2
    %v99 = vmax.f32 %v97, %v98
    %v100 = vrot.slane %v99, 1
    %v101 = vmax.f32 %v99, %v100
    %v102 = vsel %vm52, %v43, -inf
    %v103 = vrot.slane %v102, 4
    %v104 = vmax.f32 %v102, %v103
    %v105 = vrot.slane %v104, 2
    %v106 = vmax.f32 %v104, %v105
    %v107 = vrot.slane %v106, 1
    %v108 = vmax.f32 %v106, %v107
    %v109 = vsub.f32 %v36, %v59
    %v110 = vsub.f32 %v37, %v66
    %v111 = vsub.f32 %v38, %v73
    %v112 = vsub.f32 %v39, %v80
    %v113 = vsub.f32 %v40, %v87
    %v114 = vsub.f32 %v41, %v94
    %v115 = vsub.f32 %v42, %v101
    %v116 = vsub.f32 %v43, %v108
    %v117 = vmul.f32 %v109, 1.442695
    %v118 = vpow.pop %v117
    %v119 = vmul.f32 %v110, 1.442695
    %v120 = vpow.pop %v119
    %v121 = vmul.f32 %v111, 1.442695
    %v122 = vpow.pop %v121
    %v123 = vmul.f32 %v112, 1.442695
    %v124 = vpow.pop %v123
    %v125 = vmul.f32 %v113, 1.442695
    %v126 = vpow.pop %v125
    %v127 = vmul.f32 %v114, 1.442695
    %v128 = vpow.pop %v127
    %v129 = vmul.f32 %v115, 1.442695
    %v130 = vpow.pop %v129
    %v131 = vmul.f32 %v116, 1.442695
    %v132 = vpow.pop %v131
    %v141 = vrot.slane %v118, 2
    %v142 = vrot.slane %v120, 2
    %v143 = vrot.slane %v122, 2
    %v144 = vrot.slane %v124, 2
    %v145 = vrot.slane %v126, 2
    %v146 = vrot.slane %v128, 2
    %v147 = vrot.slane %v130, 2
    %v148 = vrot.slane %v132, 2
    %vm157 = vcmask 1043456
    %v158 = vsel %vm157, %v141, 0.0
    %v159 = vrot.slane %v158, 4
    %v160 = vadd.f32 %v158, %v159
    %v161 = vrot.slane %v160, 2
    %v162 = vadd.f32 %v160, %v161
    %v163 = vrot.slane %v162, 1
    %v164 = vadd.f32 %v162, %v163
    %v165 = vsel %vm157, %v142, 0.0
    %v166 = vrot.slane %v165, 4
    %v167 = vadd.f32 %v165, %v166
    %v168 = vrot.slane %v167, 2
    %v169 = vadd.f32 %v167, %v168
    %v170 = vrot.slane %v169, 1
    %v171 = vadd.f32 %v169, %v170
    %v172 = vsel %vm157, %v143, 0.0
    %v173 = vrot.slane %v172, 4
    %v174 = vadd.f32 %v172, %v173
    %v175 = vrot.slane %v174, 2
    %v176 = vadd.f32 %v174, %v175
    %v177 = vrot.slane %v176, 1
    %v178 = vadd.f32 %v176, %v177
    %v179 = vsel %vm157, %v144, 0.0
    %v180 = vrot.slane %v179, 4
    %v181 = vadd.f32 %v179, %v180
    %v182 = vrot.slane %v181, 2
    %v183 = vadd.f32 %v181, %v182
    %v184 = vrot.slane %v183, 1
    %v185 = vadd.f32 %v183, %v184
    %v186 = vsel %vm157, %v145, 0.0
    %v187 = vrot.slane %v186, 4
    %v188 = vadd.f32 %v186, %v187
    %v189 = vrot.slane %v188, 2
    %v190 = vadd.f32 %v188, %v189
    %v191 = vrot.slane %v190, 1
    %v192 = vadd.f32 %v190, %v191
    %v193 = vsel %vm157, %v146, 0.0
    %v194 = vrot.slane %v193, 4
    %v195 = vadd.f32 %v193, %v194
    %v196 = vrot.slane %v195, 2
    %v197 = vadd.f32 %v195, %v196
    %v198 = vrot.slane %v197, 1
    %v199 = vadd.f32 %v197, %v198
    %v200 = vsel %vm157, %v147, 0.0
    %v201 = vrot.slane %v200, 4
    %v202 = vadd.f32 %v200, %v201
    %v203 = vrot.slane %v202, 2
    %v204 = vadd.f32 %v202, %v203
    %v205 = vrot.slane %v204, 1
    %v206 = vadd.f32 %v204, %v205
    %v207 = vsel %vm157, %v148, 0.0
    %v208 = vrot.slane %v207, 4
    %v209 = vadd.f32 %v207, %v208
    %v210 = vrot.slane %v209, 2
    %v211 = vadd.f32 %v209, %v210
    %v212 = vrot.slane %v211, 1
    %v213 = vadd.f32 %v211, %v212
    %v214 = vlog2.pop %v164
    %v215 = vmul.f32 %v214, 0.6931472
    %v216 = vlog2.pop %v171
    %v217 = vmul.f32 %v216, 0.6931472
    %v218 = vlog2.pop %v178
    %v219 = vmul.f32 %v218, 0.6931472
    %v220 = vlog2.pop %v185
    %v221 = vmul.f32 %v220, 0.6931472
    %v222 = vlog2.pop %v192
    %v223 = vmul.f32 %v222, 0.6931472
    %v224 = vlog2.pop %v199
    %v225 = vmul.f32 %v224, 0.6931472
    %v226 = vlog2.pop %v206
    %v227 = vmul.f32 %v226, 0.6931472
    %v228 = vlog2.pop %v213
    %v229 = vmul.f32 %v228, 0.6931472
    %v230 = vadd.f32 %v59, %v215
    %v231 = vadd.f32 %v66, %v217
    %v232 = vadd.f32 %v73, %v219
    %v233 = vadd.f32 %v80, %v221
    %v234 = vadd.f32 %v87, %v223
    %v235 = vadd.f32 %v94, %v225
    %v236 = vadd.f32 %v101, %v227
    %v237 = vadd.f32 %v108, %v229
    %v238 = vmul.f32 %v36, %v44
    %v239 = vmul.f32 %v37, %v45
    %v240 = vmul.f32 %v38, %v46
    %v241 = vmul.f32 %v39, %v47
    %v242 = vmul.f32 %v40, %v48
    %v243 = vmul.f32 %v41, %v49
    %v244 = vmul.f32 %v42, %v50
    %v245 = vmul.f32 %v43, %v51
    %v254 = vrot.slane %v238, 2
    %v255 = vrot.slane %v239, 2
    %v256 = vrot.slane %v240, 2
    %v257 = vrot.slane %v241, 2
    %v258 = vrot.slane %v242, 2
    %v259 = vrot.slane %v243, 2
    %v260 = vrot.slane %v244, 2
    %v261 = vrot.slane %v245, 2
    %v270 = vsel %vm157, %v254, 0.0
    %v271 = vrot.slane %v270, 4
    %v272 = vadd.f32 %v270, %v271
    %v273 = vrot.slane %v272, 2
    %v274 = vadd.f32 %v272, %v273
    %v275 = vrot.slane %v274, 1
    %v276 = vadd.f32 %v274, %v275
    %v277 = vsel %vm157, %v255, 0.0
    %v278 = vrot.slane %v277, 4
    %v279 = vadd.f32 %v277, %v278
    %v280 = vrot.slane %v279, 2
    %v281 = vadd.f32 %v279, %v280
    %v282 = vrot.slane %v281, 1
    %v283 = vadd.f32 %v281, %v282
    %v284 = vsel %vm157, %v256, 0.0
    %v285 = vrot.slane %v284, 4
    %v286 = vadd.f32 %v284, %v285
    %v287 = vrot.slane %v286, 2
    %v288 = vadd.f32 %v286, %v287
    %v289 = vrot.slane %v288, 1
    %v290 = vadd.f32 %v288, %v289
    %v291 = vsel %vm157, %v257, 0.0
    %v292 = vrot.slane %v291, 4
    %v293 = vadd.f32 %v291, %v292
    %v294 = vrot.slane %v293, 2
    %v295 = vadd.f32 %v293, %v294
    %v296 = vrot.slane %v295, 1
    %v297 = vadd.f32 %v295, %v296
    %v298 = vsel %vm157, %v258, 0.0
    %v299 = vrot.slane %v298, 4
    %v300 = vadd.f32 %v298, %v299
    %v301 = vrot.slane %v300, 2
    %v302 = vadd.f32 %v300, %v301
    %v303 = vrot.slane %v302, 1
    %v304 = vadd.f32 %v302, %v303
    %v305 = vsel %vm157, %v259, 0.0
    %v306 = vrot.slane %v305, 4
    %v307 = vadd.f32 %v305, %v306
    %v308 = vrot.slane %v307, 2
    %v309 = vadd.f32 %v307, %v308
    %v310 = vrot.slane %v309, 1
    %v311 = vadd.f32 %v309, %v310
    %v312 = vsel %vm157, %v260, 0.0
    %v313 = vrot.slane %v312, 4
    %v314 = vadd.f32 %v312, %v313
    %v315 = vrot.slane %v314, 2
    %v316 = vadd.f32 %v314, %v315
    %v317 = vrot.slane %v316, 1
    %v318 = vadd.f32 %v316, %v317
    %v319 = vsel %vm157, %v261, 0.0
    %v320 = vrot.slane %v319, 4
    %v321 = vadd.f32 %v319, %v320
    %v322 = vrot.slane %v321, 2
    %v323 = vadd.f32 %v321, %v322
    %v324 = vrot.slane %v323, 1
    %v325 = vadd.f32 %v323, %v324
    %v326 = vsub.f32 %v230, %v276
    %v327 = vsub.f32 %v231, %v283
    %v328 = vsub.f32 %v232, %v290
    %v329 = vsub.f32 %v233, %v297
    %v330 = vsub.f32 %v234, %v304
    %v331 = vsub.f32 %v235, %v311
    %v332 = vsub.f32 %v236, %v318
    %v333 = vsub.f32 %v237, %v325
    %v342 = vrot.slane %v44, 2
    %v343 = vrot.slane %v45, 2
    %v344 = vrot.slane %v46, 2
    %v345 = vrot.slane %v47, 2
    %v346 = vrot.slane %v48, 2
    %v347 = vrot.slane %v49, 2
    %v348 = vrot.slane %v50, 2
    %v349 = vrot.slane %v51, 2
    %v358 = vadd.f32 %v44, %v342
    %v359 = vadd.f32 %v45, %v343
    %v360 = vadd.f32 %v46, %v344
    %v361 = vadd.f32 %v47, %v345
    %v362 = vadd.f32 %v48, %v346
    %v363 = vadd.f32 %v49, %v347
    %v364 = vadd.f32 %v50, %v348
    %v365 = vadd.f32 %v51, %v349
    %v366 = vrot.slane %v44, 1
    %v367 = vrot.slane %v45, 1
    %v368 = vrot.slane %v46, 1
    %v369 = vrot.slane %v47, 1
    %v370 = vrot.slane %v48, 1
    %v371 = vrot.slane %v49, 1
    %v372 = vrot.slane %v50, 1
    %v373 = vrot.slane %v51, 1
    %v382 = vadd.f32 %v44, %v366
    %v383 = vadd.f32 %v45, %v367
    %v384 = vadd.f32 %v46, %v368
    %v385 = vadd.f32 %v47, %v369
    %v386 = vadd.f32 %v48, %v370
    %v387 = vadd.f32 %v49, %v371
    %v388 = vadd.f32 %v50, %v372
    %v389 = vadd.f32 %v51, %v373
    %v398 = vrot.slane %v382, 2
    %v399 = vrot.slane %v383, 2
    %v400 = vrot.slane %v384, 2
    %v401 = vrot.slane %v385, 2
    %v402 = vrot.slane %v386, 2
    %v403 = vrot.slane %v387, 2
    %v404 = vrot.slane %v388, 2
    %v405 = vrot.slane %v389, 2
    %v414 = vadd.f32 %v382, %v398
    %v415 = vadd.f32 %v383, %v399
    %v416 = vadd.f32 %v384, %v400
    %v417 = vadd.f32 %v385, %v401
    %v418 = vadd.f32 %v386, %v402
    %v419 = vadd.f32 %v387, %v403
    %v420 = vadd.f32 %v388, %v404
    %v421 = vadd.f32 %v389, %v405
    %v422 = vsub.f32 %v44, %v36
    %v423 = vsub.f32 %v45, %v37
    %v424 = vsub.f32 %v46, %v38
    %v425 = vsub.f32 %v47, %v39
    %v426 = vsub.f32 %v48, %v40
    %v427 = vsub.f32 %v49, %v41
    %v428 = vsub.f32 %v50, %v42
    %v429 = vsub.f32 %v51, %v43
    %v430 = vmul.f32 %v326, %v414
    %v431 = vmul.f32 %v327, %v415
    %v432 = vmul.f32 %v328, %v416
    %v433 = vmul.f32 %v329, %v417
    %v434 = vmul.f32 %v330, %v418
    %v435 = vmul.f32 %v331, %v419
    %v436 = vmul.f32 %v332, %v420
    %v437 = vmul.f32 %v333, %v421
    %v438 = vmul.f32 %v422, %v422
    %v439 = vmul.f32 %v423, %v423
    %v440 = vmul.f32 %v424, %v424
    %v441 = vmul.f32 %v425, %v425
    %v442 = vmul.f32 %v426, %v426
    %v443 = vmul.f32 %v427, %v427
    %v444 = vmul.f32 %v428, %v428
    %v445 = vmul.f32 %v429, %v429
    %v454 = vrot.slane %v358, 3
    %v455 = vrot.slane %v359, 3
    %v456 = vrot.slane %v360, 3
    %v457 = vrot.slane %v361, 3
    %v458 = vrot.slane %v362, 3
    %v459 = vrot.slane %v363, 3
    %v460 = vrot.slane %v364, 3
    %v461 = vrot.slane %v365, 3
    %v470 = vmul.f32 %v438, %v454
    %v471 = vmul.f32 %v439, %v455
    %v472 = vmul.f32 %v440, %v456
    %v473 = vmul.f32 %v441, %v457
    %v474 = vmul.f32 %v442, %v458
    %v475 = vmul.f32 %v443, %v459
    %v476 = vmul.f32 %v444, %v460
    %v477 = vmul.f32 %v445, %v461
    %v478 = vrot.slane %v382, 3
    %v479 = vrot.slane %v383, 3
    %v480 = vrot.slane %v384, 3
    %v481 = vrot.slane %v385, 3
    %v482 = vrot.slane %v386, 3
    %v483 = vrot.slane %v387, 3
    %v484 = vrot.slane %v388, 3
    %v485 = vrot.slane %v389, 3
    %v494 = vmul.f32 %v438, %v478
    %v495 = vmul.f32 %v439, %v479
    %v496 = vmul.f32 %v440, %v480
    %v497 = vmul.f32 %v441, %v481
    %v498 = vmul.f32 %v442, %v482
    %v499 = vmul.f32 %v443, %v483
    %v500 = vmul.f32 %v444, %v484
    %v501 = vmul.f32 %v445, %v485
    %v510 = vrot.slane %v494, 1
    %v511 = vrot.slane %v495, 1
    %v512 = vrot.slane %v496, 1
    %v513 = vrot.slane %v497, 1
    %v514 = vrot.slane %v498, 1
    %v515 = vrot.slane %v499, 1
    %v516 = vrot.slane %v500, 1
    %v517 = vrot.slane %v501, 1
    %v526 = vadd.f32 %v470, %v510
    %v527 = vadd.f32 %v471, %v511
    %v528 = vadd.f32 %v472, %v512
    %v529 = vadd.f32 %v473, %v513
    %v530 = vadd.f32 %v474, %v514
    %v531 = vadd.f32 %v475, %v515
    %v532 = vadd.f32 %v476, %v516
    %v533 = vadd.f32 %v477, %v517
    %v534 = vmul.f32 %v526, 0.5
    %v535 = vmul.f32 %v527, 0.5
    %v536 = vmul.f32 %v528, 0.5
    %v537 = vmul.f32 %v529, 0.5
    %v538 = vmul.f32 %v530, 0.5
    %v539 = vmul.f32 %v531, 0.5
    %v540 = vmul.f32 %v532, 0.5
    %v541 = vmul.f32 %v533, 0.5
    %v550 = vrot.slane %v534, 6
    %v551 = vrot.slane %v535, 6
    %v552 = vrot.slane %v536, 6
    %v553 = vrot.slane %v537, 6
    %v554 = vrot.slane %v538, 6
    %v555 = vrot.slane %v539, 6
    %v556 = vrot.slane %v540, 6
    %v557 = vrot.slane %v541, 6
    %v566 = vadd.f32 %v430, %v550
    %v567 = vadd.f32 %v431, %v551
    %v568 = vadd.f32 %v432, %v552
    %v569 = vadd.f32 %v433, %v553
    %v570 = vadd.f32 %v434, %v554
    %v571 = vadd.f32 %v435, %v555
    %v572 = vadd.f32 %v436, %v556
    %v573 = vadd.f32 %v437, %v557
    %v574 = vlaneseq
    %v575 = vand.u32 %v574, 127
    %v576 = vadd.s32 %v575, 128
    %v577 = vadd.s32 %v575, 256
    %v578 = vadd.s32 %v575, 384
    %v579 = vadd.s32 %v575, 512
    %v580 = vadd.s32 %v575, 640
    %v581 = vadd.s32 %v575, 768
    %v582 = vadd.s32 %v575, 896
    %s583 = smul.u32 0, 1024
    %v584 = vstv %s583
    %v585 = vadd.s32 %v575, %v584
    %v586 = vadd.s32 %v576, %v584
    %v587 = vadd.s32 %v577, %v584
    %v588 = vadd.s32 %v578, %v584
    %v589 = vadd.s32 %v579, %v584
    %v590 = vadd.s32 %v580, %v584
    %v591 = vadd.s32 %v581, %v584
    %v592 = vadd.s32 %v582, %v584
    %vm593 = vcmp.lt.s32.totalorder %v585, 1000
    %vm594 = vcmp.lt.s32.totalorder %v586, 1000
    %vm595 = vcmp.lt.s32.totalorder %v587, 1000
    %vm596 = vcmp.lt.s32.totalorder %v588, 1000
    %vm597 = vcmp.lt.s32.totalorder %v589, 1000
    %vm598 = vcmp.lt.s32.totalorder %v590, 1000
    %vm599 = vcmp.lt.s32.totalorder %v591, 1000
    %vm600 = vcmp.lt.s32.totalorder %v592, 1000
    %v601 = vsel %vm593, %v566, 0.0
    %v602 = vsel %vm594, %v567, 0.0
    %v603 = vsel %vm595, %v568, 0.0
    %v604 = vsel %vm596, %v569, 0.0
    %v605 = vsel %vm597, %v570, 0.0
    %v606 = vsel %vm598, %v571, 0.0
    %v607 = vsel %vm599, %v572, 0.0
    %v608 = vsel %vm600, %v573, 0.0
    %v617 = vrot.slane %v601, 2
    %v618 = vrot.slane %v602, 2
    %v619 = vrot.slane %v603, 2
    %v620 = vrot.slane %v604, 2
    %v621 = vrot.slane %v605, 2
    %v622 = vrot.slane %v606, 2
    %v623 = vrot.slane %v607, 2
    %v624 = vrot.slane %v608, 2
    %vm633 = vcmask 1040384
    %v634 = vsel %vm633, %v617, 0.0
    %v635 = vsel %vm633, %v618, 0.0
    %v636 = vadd.f32 %v634, %v635
    %v637 = vsel %vm633, %v619, 0.0
    %v638 = vadd.f32 %v636, %v637
    %v639 = vsel %vm633, %v620, 0.0
    %v640 = vadd.f32 %v638, %v639
    %v641 = vsel %vm633, %v621, 0.0
    %v642 = vadd.f32 %v640, %v641
    %v643 = vsel %vm633, %v622, 0.0
    %v644 = vadd.f32 %v642, %v643
    %v645 = vsel %vm633, %v623, 0.0
    %v646 = vadd.f32 %v644, %v645
    %v647 = vsel %vm633, %v624, 0.0
    %v648 = vadd.f32 %v646, %v647
    %649 = vadd.xlane.f32.xlu0 %v648
    %v650 = vpop.xlane.xlu0 %649
    %v651 = vrot.slane %v650, 4
    %v652 = vadd.f32 %v650, %v651
    %v653 = vrot.slane %v652, 2
    %v654 = vadd.f32 %v652, %v653
    %v655 = vrot.slane %v654, 1
    %v656 = vadd.f32 %v654, %v655
    %s657 = vtos %v656
    %s658 = scalar_lea.smem [#allocation7], 0
    %659 = sst [smem:[%s658]] %s657
    // Predicated region
    $region18: #{tpu_custom_call.1} parent=1 // pred_check
      _
    $region19: #{tpu_custom_call.1} parent=1 // pred_check_branch
      %661 = sbr.rel (0) target = $region21
    $region20: #{tpu_custom_call.1} parent=1 // pred_region
      %s663 = ssub.s32 16, 16
      %664 = vsyncadd [#allocation4], %s663
      %667 = dma.smem_to_hbm [#allocation7], 16, %s2, [#allocation4]
    $region21: #{tpu_custom_call.1} parent=1 // pred_fallthru
      _
    // Predicated region
    $region22: #{tpu_custom_call.1} parent=1 // pred_check
      _
    $region23: #{tpu_custom_call.1} parent=1 // pred_check_branch
      %669 = sbr.rel (0) target = $region25
    $region24: #{tpu_custom_call.1} parent=1 // pred_region
      %670 = dma.done [#allocation4], 16
    $region25: #{tpu_custom_call.1} parent=1 // pred_fallthru
      _
    %671 = sfence
    %672 = vsyncpa [#allocation3], 1
    %673 = vsyncpa [#allocation6], 1
    %674 = vsyncpa [#allocation4], 1

</llo_original>
